<compile_context>
chip_gen: v7x
topology: tpu7x:2x2x1
jax: 0.10.0
libtpu: 0.0.40
codegen_flags: <defaults>
</compile_context>

<pallas_src>
import functools

import jax
import jax.numpy as jnp
from jax import lax
from jax.experimental import pallas as pl
from jax.experimental.pallas import tpu as pltpu


def _hash_u32(x):
    """splitmix32-style mixer on uint32 (pure jnp -> runs on TPU and interpret)."""
    x = x ^ (x >> jnp.uint32(16))
    x = x * jnp.uint32(0x7FEB352D)
    x = x ^ (x >> jnp.uint32(15))
    x = x * jnp.uint32(0x846CA68B)
    x = x ^ (x >> jnp.uint32(16))
    return x


def _pe_dropout_kernel(seed_ref, x_ref, pe_ref, o_ref, *,
                       dropout_p: float, block_rows: int, row_len: int):
    """One grid step handles a lane-dense (block_rows, row_len) tile."""
    x = x_ref[...]                      # (TB, Ld)
    pe = pe_ref[...]                    # (1, Ld), resident across the grid
    y = x + pe                          # broadcast add over batch rows

    if dropout_p >= 1.0:
        # Degenerate case: p == 1 drops everything (avoids uint32 threshold overflow).
        o_ref[...] = jnp.zeros_like(y).astype(o_ref.dtype)
        return

    if dropout_p > 0.0:
        # Counter-based dropout mask: deterministic in (seed, global element
        # index), independent of tiling / grid execution order.
        b = pl.program_id(0)
        row = lax.broadcasted_iota(jnp.uint32, (block_rows, row_len), 0)
        col = lax.broadcasted_iota(jnp.uint32, (block_rows, row_len), 1)
        g_row = row + (b * block_rows).astype(jnp.uint32)
        idx = g_row * jnp.uint32(row_len) + col
        seed_u = seed_ref[0].astype(jnp.uint32)
        bits = _hash_u32(idx ^ (seed_u * jnp.uint32(0x9E3779B9)))

        # keep with probability 1 - p:  P(bits >= floor(p * 2^32)) = 1 - p
        # (up to 2^-32 truncation bias, negligible).
        threshold = jnp.uint32(min(int(dropout_p * 4294967296.0), 4294967295))
        keep = (bits >= threshold).astype(jnp.float32)
        scale = jnp.float32(1.0 / (1.0 - dropout_p))
        y = y * (keep * scale)          # single fused multiply, no select

    o_ref[...] = y.astype(o_ref.dtype)


def learnable_temporal_positional_encoding(X, pe, index=None, *,
                                           dropout_p: float = 0.1,
                                           seed: int = 0,
                                           training: bool = True):
    """
    Args:
      X:     (BN, L, d) float32      (BN = B*N, L = L/P temporal patches)
      pe:    (max_len, d) float32 learnable positional table
      index: None or int array of shape (L,)
      seed:  int dropout seed (caller must vary it per training step, otherwise
             the dropout mask is identical across steps)
    Returns:
      (BN, L, d) float32
    """
    BN, L, d = X.shape

    # Glue: select the positional rows in plain JAX (simple slice / gather).
    if index is None:
        pe_sel = pe[:L, :]
    else:
        pe_sel = pe[index, :]
    pe_sel = pe_sel.astype(X.dtype)

    # Lane-dense layout: flatten (L, d) into one wide trailing dim.
    Ld = L * d
    x_flat = X.reshape(BN, Ld)
    pe_flat = pe_sel.reshape(1, Ld)

    # Row-block size: ~2 MiB per X block.  Double-buffered X-in + out blocks
    # (~8 MiB) plus the resident pe row fit comfortably inside the default
    # scoped VMEM on v5e (16 MiB), v6e (32 MiB) and v7x (32 MiB).
    bytes_per_row = Ld * X.dtype.itemsize
    target_block_bytes = 2 * 1024 * 1024
    tb = max(1, target_block_bytes // max(1, bytes_per_row))
    if tb >= BN:
        tb = BN                                   # full batch dim is always legal
    else:
        tb = min(BN, max(8, (tb // 8) * 8))       # sublane multiple of 8
    grid = (pl.cdiv(BN, tb),)

    p = float(dropout_p) if training else 0.0
    kernel = functools.partial(_pe_dropout_kernel, dropout_p=p,
                               block_rows=tb, row_len=Ld)

    seed_arr = jnp.asarray([seed], dtype=jnp.int32)

    out_flat = pl.pallas_call(
        kernel,
        out_shape=jax.ShapeDtypeStruct((BN, Ld), X.dtype),
        grid_spec=pltpu.PrefetchScalarGridSpec(
            num_scalar_prefetch=1,
            grid=grid,
            in_specs=[
                pl.BlockSpec((tb, Ld), lambda i, seed_ref: (i, 0)),
                pl.BlockSpec((1, Ld), lambda i, seed_ref: (0, 0)),  # pe: resident
            ],
            out_specs=pl.BlockSpec((tb, Ld), lambda i, seed_ref: (i, 0)),
        ),
        compiler_params=pltpu.CompilerParams(
            # Mask is a pure function of (seed, element index): safe to shard
            # the batch axis across TensorCores (v7x megacore).
            dimension_semantics=("parallel",),
        ),
    )(seed_arr, x_flat, pe_flat)

    return out_flat.reshape(BN, L, d)


if __name__ == "__main__":
    key = jax.random.PRNGKey(0)
    k_pe, k_x = jax.random.split(key)

    # Small shapes consistent with the module: X is [B*N, L/P, d]
    B, N, L, d = 2, 4, 8, 32
    BN = B * N
    max_len = 1000

    # Parameter init matching nn.init.uniform_(-0.02, 0.02)
    pe = jax.random.uniform(k_pe, (max_len, d), dtype=jnp.float32,
                            minval=-0.02, maxval=0.02)
    X = jax.random.normal(k_x, (BN, L, d), dtype=jnp.float32)

    # index=None path (pe[:L]) with dropout (training mode)
    out_none = learnable_temporal_positional_encoding(
        X, pe, index=None, dropout_p=0.1, seed=0, training=True)
    jax.block_until_ready(out_none)

    # explicit index path (pe[index])
    index = jnp.arange(4, 4 + L, dtype=jnp.int32)
    out_idx = learnable_temporal_positional_encoding(
        X, pe, index=index, dropout_p=0.1, seed=0, training=True)
    jax.block_until_ready(out_idx)

    # sanity 1: eval mode (no dropout) must equal the pure-JAX reference
    out_eval = learnable_temporal_positional_encoding(
        X, pe, index=None, dropout_p=0.1, seed=0, training=False)
    ref_eval = X + pe[:L][None, :, :]
    assert jnp.allclose(out_eval, ref_eval, atol=1e-6), "mismatch vs reference"

    # sanity 2: training-mode elements are either dropped (0) or scaled by 1/(1-p)
    ref_scaled = (X + pe[:L][None, :, :]) / (1.0 - 0.1)
    ok = jnp.isclose(out_none, 0.0, atol=1e-7) | jnp.isclose(out_none, ref_scaled, atol=1e-5)
    assert bool(jnp.all(ok)), "dropout mask structure mismatch"

    print("KERNEL_OK")
</pallas_src>

<mosaic_0001>
module attributes {stable_mosaic.version = 11 : i64} {
  func.func @_pe_dropout_kernel(%arg0: i32, %arg1: memref<1xi32, #tpu.memory_space<smem>>, %arg2: memref<8x256xf32, #tpu.memory_space<vmem>>, %arg3: memref<1x256xf32, #tpu.memory_space<vmem>>, %arg4: memref<8x256xf32, #tpu.memory_space<vmem>>) attributes {dimension_semantics = [#tpu.dimension_semantics<parallel>], iteration_bounds = array<i64: 1>, scalar_prefetch = 1 : i64, scratch_operands = 0 : i64, tpu.core_type = #tpu.core_type<tc>, window_params = [{transform_indices = @transform_0, window_bounds = array<i64: 8, 256>}, {pipeline_mode = #tpu.pipeline_mode<synchronous>, transform_indices = @transform_1, window_bounds = array<i64: 1, 256>}, {transform_indices = @transform_2, window_bounds = array<i64: 8, 256>}]} {
    %c0 = arith.constant 0 : index
    %c0_0 = arith.constant 0 : index
    %0 = vector.load %arg2[%c0, %c0_0] : memref<8x256xf32, #tpu.memory_space<vmem>>, vector<8x256xf32>
    %c0_1 = arith.constant 0 : index
    %c0_2 = arith.constant 0 : index
    %1 = vector.load %arg3[%c0_1, %c0_2] : memref<1x256xf32, #tpu.memory_space<vmem>>, vector<1x256xf32>
    %2 = vector.broadcast %1 : vector<1x256xf32> to vector<8x256xf32>
    %3 = arith.addf %0, %2 : vector<8x256xf32>
    %4 = tpu.iota {dimensions = array<i32: 0>} : vector<8x256xi32>
    %5 = tpu.iota {dimensions = array<i32: 1>} : vector<8x256xi32>
    %c8_i32 = arith.constant 8 : i32
    %6 = arith.muli %arg0, %c8_i32 : i32
    %7 = vector.broadcast %6 : i32 to vector<8x256xi32>
    %8 = arith.addi %4, %7 : vector<8x256xi32>
    %c256_i32 = arith.constant 256 : i32
    %9 = vector.broadcast %c256_i32 : i32 to vector<8x256xi32>
    %10 = arith.muli %8, %9 : vector<8x256xi32>
    %11 = arith.addi %10, %5 : vector<8x256xi32>
    %c0_3 = arith.constant 0 : index
    %12 = memref.load %arg1[%c0_3] : memref<1xi32, #tpu.memory_space<smem>>
    %c-1640531527_i32 = arith.constant -1640531527 : i32
    %13 = arith.muli %12, %c-1640531527_i32 : i32
    %14 = vector.broadcast %13 : i32 to vector<8x256xi32>
    %15 = arith.xori %11, %14 : vector<8x256xi32>
    %c16_i32 = arith.constant 16 : i32
    %16 = vector.broadcast %c16_i32 : i32 to vector<8x256xi32>
    %17 = arith.shrui %15, %16 : vector<8x256xi32>
    %18 = arith.xori %15, %17 : vector<8x256xi32>
    %c2146121005_i32 = arith.constant 2146121005 : i32
    %19 = vector.broadcast %c2146121005_i32 : i32 to vector<8x256xi32>
    %20 = arith.muli %18, %19 : vector<8x256xi32>
    %c15_i32 = arith.constant 15 : i32
    %21 = vector.broadcast %c15_i32 : i32 to vector<8x256xi32>
    %22 = arith.shrui %20, %21 : vector<8x256xi32>
    %23 = arith.xori %20, %22 : vector<8x256xi32>
    %c-2073254261_i32 = arith.constant -2073254261 : i32
    %24 = vector.broadcast %c-2073254261_i32 : i32 to vector<8x256xi32>
    %25 = arith.muli %23, %24 : vector<8x256xi32>
    %c16_i32_4 = arith.constant 16 : i32
    %26 = vector.broadcast %c16_i32_4 : i32 to vector<8x256xi32>
    %27 = arith.shrui %25, %26 : vector<8x256xi32>
    %28 = arith.xori %25, %27 : vector<8x256xi32>
    %c429496729_i32 = arith.constant 429496729 : i32
    %29 = vector.broadcast %c429496729_i32 : i32 to vector<8x256xi32>
    %30 = arith.cmpi uge, %28, %29 : vector<8x256xi32>
    %31 = arith.extui %30 : vector<8x256xi1> to vector<8x256xi32>
    %32 = arith.sitofp %31 : vector<8x256xi32> to vector<8x256xf32>
    %cst = arith.constant 1.11111116 : f32
    %33 = vector.broadcast %cst : f32 to vector<8x256xf32>
    %34 = arith.mulf %32, %33 : vector<8x256xf32>
    %35 = arith.mulf %3, %34 : vector<8x256xf32>
    %c0_5 = arith.constant 0 : index
    %c0_6 = arith.constant 0 : index
    %36 = vector.load %arg4[%c0_5, %c0_6] : memref<8x256xf32, #tpu.memory_space<vmem>>, vector<8x256xf32>
    tpu.vector_store %arg4[%c0_5, %c0_6], %35 {strides = array<i32>} : memref<8x256xf32, #tpu.memory_space<vmem>>, vector<8x256xf32>,
    return
  }
  func.func @transform_0(%arg0: i32, %arg1: memref<1xi32, #tpu.memory_space<smem>>) -> (i32, i32) {
    %c0_i32 = arith.constant 0 : i32
    %c0_i32_0 = arith.constant 0 : i32
    return %arg0, %c0_i32 : i32, i32
  }
  func.func @transform_1(%arg0: i32, %arg1: memref<1xi32, #tpu.memory_space<smem>>) -> (i32, i32) {
    %c0_i32 = arith.constant 0 : i32
    %c0_i32_0 = arith.constant 0 : i32
    %c0_i32_1 = arith.constant 0 : i32
    return %c0_i32, %c0_i32_0 : i32, i32
  }
  func.func @transform_2(%arg0: i32, %arg1: memref<1xi32, #tpu.memory_space<smem>>) -> (i32, i32) {
    %c0_i32 = arith.constant 0 : i32
    %c0_i32_0 = arith.constant 0 : i32
    return %arg0, %c0_i32 : i32, i32
  }
}

</mosaic_0001>

<llo_original>
// kernel: tpu_custom_call.1
$region0: #{tpu_custom_call.1}
  #allocation0 [shape = 'u32[]', space=smem, size = 0x4, offset = 0x4, fixed_abs, tag = 'smem constant byte address 0x4 - core index']
  #allocation1 [shape = 'u32[144,128]{1,0:T(1,128)}', space=vmem, size = 0x12000, scoped, tag = 'internal scratch']
  #allocation2 [shape = 's32[1]{0}', space=sflag, size = 0x4, scoped, tag = 'scoped memory for tpu_custom_call.1']
  #allocation3 [shape = 's32[1]{0:T(128)S(6)}', space=smem, size = 0x200, scoped, tag = 'prefetched SMEM operand 0']
  %s0 = inlined_call_operand.<no memory space> [shape: s32[1], index: 0, kind: input, shape index: {}]
  %s1 = inlined_call_operand.hbm [shape: f32[8,256], index: 1, kind: input, shape index: {}]
  %s2 = inlined_call_operand.vmem [shape: f32[1,256], index: 2, kind: input, shape index: {}]
  %s3 = inlined_call_operand.hbm [shape: f32[8,256], index: 3, kind: output, shape index: {}]
  %s4 = sld [smem:[#allocation0]]
  $region22: #{tpu_custom_call.1} parent=0
    _
  %s6 = ssub.s32 1, %s4
  %s7 = scalar_select 0, %s6, %s4
  %8 = sst [smem:[#allocation3]] %s0
  $region1: #{tpu_custom_call.1} parent=0
    #allocation4 [shape = 'u8[8192]{0}', space=vmem, size = 0x2000, scoped, tag = 'input window, operand 1, single buffered']
    #allocation5 [shape = 's32[1]{0}', space=sflag, size = 0x4, scoped, tag = 'scoped memory for tpu_custom_call.1']
    #allocation6 [shape = 's32[1]{0}', space=sflag, size = 0x4, scoped, tag = 'scoped memory for tpu_custom_call.1']
    #allocation7 [shape = 'u8[8192]{0}', space=vmem, size = 0x2000, scoped, tag = 'output window, operand 0, single buffered']
    %9 = vsyncpa [#allocation5], 0
    %10 = vsyncpa [#allocation6], 0
    // Predicated region
    $region2: #{tpu_custom_call.1} parent=1 // pred_check
      _
    $region3: #{tpu_custom_call.1} parent=1 // pred_check_branch
      %12 = sbr.rel (0) target = $region5
    $region4: #{tpu_custom_call.1} parent=1 // pred_region
      %s14 = ssub.s32 256, 256
      %15 = vsyncadd [#allocation5], %s14
      %s17 = sshll.u32 [#allocation4], 4
      %s18 = int_to_ptr.vmem [resolvable:$true] %s17
      %20 = dma.hbm_to_vmem [thread:$0]  %s1, 256, %s18, [#allocation5]
    $region5: #{tpu_custom_call.1} parent=1 // pred_fallthru
      _
    // Predicated region
    $region6: #{tpu_custom_call.1} parent=1 // pred_check
      _
    $region7: #{tpu_custom_call.1} parent=1 // pred_check_branch
      %22 = sbr.rel (0) target = $region9
    $region8: #{tpu_custom_call.1} parent=1 // pred_region
      _
    $region9: #{tpu_custom_call.1} parent=1 // pred_fallthru
      _
    // Predicated region
    $region10: #{tpu_custom_call.1} parent=1 // pred_check
      _
    $region11: #{tpu_custom_call.1} parent=1 // pred_check_branch
      %24 = sbr.rel (0) target = $region13
    $region12: #{tpu_custom_call.1} parent=1 // pred_region
      %25 = dma.done [#allocation5], 256
    $region13: #{tpu_custom_call.1} parent=1 // pred_fallthru
      _
    %v26 = vld [vmem:[#allocation4] sm:$0xff]
    %v27 = vld [vmem:[#allocation4 + $0x8] sm:$0xff]
    %v28 = vld [vmem:[%s2] sm:$0x3]
    %v30 = vlaneseq
    %v31 = vshrl.u32 %v30, 7
    %v32 = vsub.s32 0, %v31
    %v33 = vrot.slane %v28, %v32
    %v34 = vlaneseq
    %v35 = vshrl.u32 %v34, 7
    %v36 = vsub.s32 1, %v35
    %v37 = vrot.slane %v28, %v36
    %v40 = vadd.f32 %v26, %v33
    %v41 = vadd.f32 %v27, %v37
    %v42 = vlaneseq
    %v43 = vshrl.u32 %v42, 7
    %v44 = vlaneseq
    %v45 = vand.u32 %v44, 127
    %v46 = vadd.s32 %v45, 128
    %s47 = smul.u32 0, 8
    %v48 = vstv %s47
    %v49 = vadd.s32 %v43, %v48
    %v50 = vmul.u32 %v49, 256
    %v51 = vadd.s32 %v50, %v45
    %v52 = vadd.s32 %v50, %v46
    %s53 = sld [smem:[#allocation3]]
    %s54 = smul.u32 %s53, 2654435769
    %v55 = vstv %s54
    %v56 = vxor.u32 %v51, %v55
    %v57 = vxor.u32 %v52, %v55
    %v58 = vshrl.u32 %v56, 16
    %v59 = vshrl.u32 %v57, 16
    %v60 = vxor.u32 %v56, %v58
    %v61 = vxor.u32 %v57, %v59
    %v62 = vmul.u32 %v60, 2146121005
    %v63 = vmul.u32 %v61, 2146121005
    %v64 = vshrl.u32 %v62, 15
    %v65 = vshrl.u32 %v63, 15
    %v66 = vxor.u32 %v62, %v64
    %v67 = vxor.u32 %v63, %v65
    %v68 = vmul.u32 %v66, 2221713035
    %v69 = vmul.u32 %v67, 2221713035
    %v70 = vshrl.u32 %v68, 16
    %v71 = vshrl.u32 %v69, 16
    %v72 = vxor.u32 %v68, %v70
    %v73 = vxor.u32 %v69, %v71
    %vm74 = vcmp.ge.u32.totalorder %v72, 429496729
    %vm75 = vcmp.ge.u32.totalorder %v73, 429496729
    %v76 = vsel %vm74, 1, 0
    %v77 = vsel %vm75, 1, 0
    %v78 = vcvt.s32.f32 %v76
    %v79 = vcvt.s32.f32 %v77
    %v80 = vmul.f32 %v78, 1.1111112
    %v81 = vmul.f32 %v79, 1.1111112
    %v82 = vmul.f32 %v40, %v80
    %v83 = vmul.f32 %v41, %v81
    %84 = vst [vmem:[#allocation7] sm:$0xff] %v82
    %85 = vst [vmem:[#allocation7 + $0x8] sm:$0xff] %v83
    // Predicated region
    $region14: #{tpu_custom_call.1} parent=1 // pred_check
      _
    $region15: #{tpu_custom_call.1} parent=1 // pred_check_branch
      %87 = sbr.rel (0) target = $region17
    $region16: #{tpu_custom_call.1} parent=1 // pred_region
      %s89 = ssub.s32 256, 256
      %90 = vsyncadd [#allocation6], %s89
      %s92 = sshll.u32 [#allocation7], 4
      %s93 = int_to_ptr.vmem [resolvable:$true] %s92
      %95 = dma.vmem_to_hbm [thread:$0]  %s93, 256, %s3, [#allocation6]
    $region17: #{tpu_custom_call.1} parent=1 // pred_fallthru
      _
    // Predicated region
    $region18: #{tpu_custom_call.1} parent=1 // pred_check
      _
    $region19: #{tpu_custom_call.1} parent=1 // pred_check_branch
      %97 = sbr.rel (0) target = $region21
    $region20: #{tpu_custom_call.1} parent=1 // pred_region
      %98 = dma.done [#allocation6], 256
    $region21: #{tpu_custom_call.1} parent=1 // pred_fallthru
      _
    %99 = vsyncpa [#allocation5], 1
    %100 = vsyncpa [#allocation6], 1

</llo_original>
